<compile_context>
chip_gen: v7x
topology: tpu7x:2x2x1
jax: 0.10.0
libtpu: 0.0.40
codegen_flags: <defaults>
</compile_context>

<pallas_src>
import jax
import jax.numpy as jnp
from jax.experimental import pallas as pl
from jax.experimental.pallas import tpu as pltpu

ALPHA = 0.2  # LeakyReLU negative slope of the GAT attention mechanism


def _pick_block_b(B, N, target_rows=128):
    """Largest batch tile Bt dividing B with Bt*N <= target_rows.

    Keeps >= 2 grid steps when B allows so the 'parallel' grid axis can be
    split across v7x's two TensorCores (and the pipeline has >= 2 steps).
    target_rows=128 saturates the v5e MXU; pass block_b explicitly to target
    256 rows on v6e/v7x.
    """
    if N % 8 != 0:
        return 1  # keep the in-kernel (Bt, N) <-> (Bt*N,) reshapes trivially legal
    best = 1
    for bt in range(1, B + 1):
        if B % bt != 0 or bt * N > target_rows:
            continue
        if B >= 2 and B // bt < 2:
            continue  # don't collapse to a single grid step (v7x: 2 TCs)
        best = bt
    return best


def _make_kernel(bt, n, h):
    btn = bt * n

    def kernel(x_ref, adj_ref, waug_ref, w1_ref, b1_ref, w2_ref, b2_ref, out_ref):
        md = w1_ref.dtype  # matmul operand dtype (f32 default, bf16 optional)

        # --- fused projection: one MXU pass gives [Wh | Wh@a1 | Wh@a2] -----
        x2 = x_ref[...].reshape(btn, -1)                          # (Bt*N, D_in)
        wha = jnp.dot(x2, waug_ref[...],
                      preferred_element_type=jnp.float32)         # (Bt*N, H+2)
        wha3 = wha.reshape(bt, n, h + 2)
        Wh = wha3[:, :, :h]                                       # (Bt, N, H)
        e1 = wha3[:, :, h:h + 1]                                  # (Bt, N, 1)
        e2 = wha3[:, :, h + 1:h + 2]                              # (Bt, N, 1)

        # --- attention logits: e_ij = LeakyReLU(e1_i + e2_j) ----------------
        # Broadcast e2 along rows via a rank-1 batched matmul (q@k^T pattern);
        # avoids a minor-dims transpose and the MXU is idle here anyway.
        ones_col = jnp.ones_like(e1)
        e2_row = jax.lax.dot_general(
            ones_col, e2, (((2,), (2,)), ((0,), (0,))),
            preferred_element_type=jnp.float32)                   # (Bt, N, N)
        e = e1 + e2_row
        e = jnp.where(e > 0, e, ALPHA * e)                        # LeakyReLU

        # --- adjacency mask + softmax over neighbours (last axis) -----------
        adj = adj_ref[...]
        e = jnp.where(adj > 0, e, jnp.float32(-9e15))
        m = jnp.max(e, axis=-1, keepdims=True)
        p = jnp.exp(e - m)
        denom = jnp.sum(p, axis=-1, keepdims=True)
        r = pl.reciprocal(denom, approx=True)                     # EUP estimate
        r = r * (2.0 - denom * r)                                 # 1 Newton step -> f32 acc.
        att = p * r

        # --- aggregate + ELU (concat=True path) -----------------------------
        hagg = jnp.einsum('bij,bjh->bih', att.astype(md), Wh.astype(md),
                          preferred_element_type=jnp.float32)     # (Bt, N, H)
        hagg = jnp.where(hagg > 0, hagg,
                         jnp.exp(jnp.minimum(hagg, 0.0)) - 1.0)   # overflow-safe ELU

        # --- head_mlp: Linear -> ReLU -> Linear(H, 1) ------------------------
        hf = hagg.reshape(btn, h)                                 # (Bt*N, H)
        h1 = jnp.dot(hf.astype(md), w1_ref[...],
                     preferred_element_type=jnp.float32) + b1_ref[...]
        h1 = jnp.maximum(h1, 0.0)
        # Final (H,1) linear as (1,H) x (Bt*N,H)^T: result row is lane-dense
        # (nodes on the lane axis), so the store is not a 1-lane masked vst.
        out_row = jax.lax.dot_general(
            w2_ref[...], h1.astype(md), (((1,), (1,)), ((), ())),
            preferred_element_type=jnp.float32) + b2_ref[...]     # (1, Bt*N)
        out_ref[0] = out_row

    return kernel


def gat_simple(x, adj, params, *, block_b=None, matmul_dtype=jnp.float32):
    """x: (B, N, D_in), adj: (B, N, N) -> (B, N, 1)."""
    B, N, D_in = x.shape
    W, a1, a2, W1, b1, W2, b2 = (params[k] for k in
                                 ("W", "a1", "a2", "W1", "b1", "W2", "b2"))
    H = W.shape[1]
    D_out = W2.shape[1]
    assert D_out == 1, "kernel is specialised for dim_out=1 (module default)"
    assert W1.shape == (H, H)

    bt = _pick_block_b(B, N) if block_b is None else block_b
    assert B % bt == 0
    G = B // bt
    BtN = bt * N

    # Parameter prep (once, outside the kernel):
    #  * fuse the two attention mat-vecs into the projection matmul,
    #  * present W2 as a (1, H) row, biases as f32 rows (broadcast once/step).
    W_aug = jnp.concatenate([W, W @ a1, W @ a2], axis=1).astype(matmul_dtype)  # (D_in, H+2)
    W1c = W1.astype(matmul_dtype)
    w2_row = W2.reshape(1, H).astype(matmul_dtype)
    b1c = b1.reshape(1, H).astype(jnp.float32)
    b2c = b2.reshape(1, 1).astype(jnp.float32)
    xc = x.astype(matmul_dtype)

    kernel = _make_kernel(bt, N, H)
    full = lambda g: (0, 0)

    out_slab = pl.pallas_call(
        kernel,
        out_shape=jax.ShapeDtypeStruct((G, 1, BtN), jnp.float32),
        grid_spec=pltpu.PrefetchScalarGridSpec(
            num_scalar_prefetch=0,
            grid=(G,),
            in_specs=[
                pl.BlockSpec((bt, N, D_in), lambda g: (g, 0, 0)),   # x tile
                pl.BlockSpec((bt, N, N),    lambda g: (g, 0, 0)),   # adj tile
                pl.BlockSpec((D_in, H + 2), full),                  # W_aug
                pl.BlockSpec((H, H),        full),                  # W1
                pl.BlockSpec((1, H),        full),                  # b1
                pl.BlockSpec((1, H),        full),                  # W2 (row)
                pl.BlockSpec((1, 1),        full),                  # b2
            ],
            out_specs=pl.BlockSpec((1, 1, BtN), lambda g: (g, 0, 0)),
        ),
        compiler_params=pltpu.CompilerParams(
            dimension_semantics=("parallel",)),
    )(xc, adj, W_aug, W1c, b1c, w2_row, b2c)

    # Lane-dense (G, 1, Bt*N) slab -> (B, N, 1)
    return out_slab.reshape(B, N, 1)


def _reference(x, adj, p):
    """Pure-JAX reference mirroring the PyTorch forward."""
    Wh = x @ p["W"]
    e = Wh @ p["a1"] + jnp.swapaxes(Wh @ p["a2"], -1, -2)
    e = jnp.where(e > 0, e, ALPHA * e)
    att = jax.nn.softmax(jnp.where(adj > 0, e, -9e15), axis=-1)
    h = att @ Wh
    h = jnp.where(h > 0, h, jnp.exp(h) - 1.0)
    h1 = jnp.maximum(h @ p["W1"] + p["b1"], 0.0)
    return h1 @ p["W2"] + p["b2"]


if __name__ == "__main__":
    B, N = 2, 8
    dim_in, dim_hidden, dim_out, num_heads = 16, 32, 1, 1  # num_heads=1 (default)

    key = jax.random.PRNGKey(0)
    ks = jax.random.split(key, 10)

    # deterministic synthetic parameters (shapes from GATSimple_RecSim.__init__)
    params = {
        "W":  jax.random.normal(ks[0], (dim_in, dim_hidden), jnp.float32) * 0.1,
        "a1": jax.random.normal(ks[1], (dim_hidden, 1), jnp.float32) * 0.1,
        "a2": jax.random.normal(ks[2], (dim_hidden, 1), jnp.float32) * 0.1,
        "W1": jax.random.normal(ks[3], (dim_hidden * num_heads, dim_hidden),
                                jnp.float32) * 0.1,
        "b1": jax.random.normal(ks[4], (1, dim_hidden), jnp.float32) * 0.1,
        "W2": jax.random.normal(ks[5], (dim_hidden, dim_out), jnp.float32) * 0.1,
        "b2": jax.random.normal(ks[6], (1, dim_out), jnp.float32) * 0.1,
    }

    x = jax.random.normal(ks[7], (B, N, dim_in), jnp.float32)
    # random symmetric-ish 0/1 adjacency with self loops
    adj = (jax.random.uniform(ks[8], (B, N, N)) > 0.5).astype(jnp.float32)
    adj = jnp.maximum(adj, jnp.eye(N, dtype=jnp.float32)[None])

    out = jax.block_until_ready(gat_simple(x, adj, params))
    ref = _reference(x, adj, params)
    assert out.shape == (B, N, dim_out)
    assert jnp.allclose(out, ref, atol=1e-4, rtol=1e-4), (
        f"max err {jnp.max(jnp.abs(out - ref))}")
    print("KERNEL_OK")
</pallas_src>

<mosaic_0001>
module attributes {stable_mosaic.version = 11 : i64} {
  func.func @kernel(%arg0: i32, %arg1: memref<1x8x16xf32, #tpu.memory_space<vmem>>, %arg2: memref<1x8x8xf32, #tpu.memory_space<vmem>>, %arg3: memref<16x34xf32, #tpu.memory_space<vmem>>, %arg4: memref<32x32xf32, #tpu.memory_space<vmem>>, %arg5: memref<1x32xf32, #tpu.memory_space<vmem>>, %arg6: memref<1x32xf32, #tpu.memory_space<vmem>>, %arg7: memref<1x1xf32, #tpu.memory_space<vmem>>, %arg8: memref<1x1x8xf32, #tpu.memory_space<vmem>>) attributes {dimension_semantics = [#tpu.dimension_semantics<parallel>], iteration_bounds = array<i64: 2>, scalar_prefetch = 0 : i64, scratch_operands = 0 : i64, tpu.core_type = #tpu.core_type<tc>, window_params = [{transform_indices = @transform_0, window_bounds = array<i64: 1, 8, 16>}, {transform_indices = @transform_1, window_bounds = array<i64: 1, 8, 8>}, {pipeline_mode = #tpu.pipeline_mode<synchronous>, transform_indices = @transform_2, window_bounds = array<i64: 16, 34>}, {pipeline_mode = #tpu.pipeline_mode<synchronous>, transform_indices = @transform_3, window_bounds = array<i64: 32, 32>}, {pipeline_mode = #tpu.pipeline_mode<synchronous>, transform_indices = @transform_4, window_bounds = array<i64: 1, 32>}, {pipeline_mode = #tpu.pipeline_mode<synchronous>, transform_indices = @transform_5, window_bounds = array<i64: 1, 32>}, {pipeline_mode = #tpu.pipeline_mode<synchronous>, transform_indices = @transform_6, window_bounds = array<i64: 1, 1>}, {transform_indices = @transform_7, window_bounds = array<i64: 1, 1, 8>}]} {
    %c0 = arith.constant 0 : index
    %c0_0 = arith.constant 0 : index
    %c0_1 = arith.constant 0 : index
    %0 = vector.load %arg1[%c0, %c0_0, %c0_1] : memref<1x8x16xf32, #tpu.memory_space<vmem>>, vector<1x8x16xf32>
    %1 = vector.shape_cast %0 : vector<1x8x16xf32> to vector<8x16xf32>
    %c0_2 = arith.constant 0 : index
    %c0_3 = arith.constant 0 : index
    %2 = vector.load %arg3[%c0_2, %c0_3] : memref<16x34xf32, #tpu.memory_space<vmem>>, vector<16x34xf32>
    %cst = arith.constant dense<0.000000e+00> : vector<8x34xf32>
    %3 = tpu.matmul %1, %2, %cst {dimension_numbers = #tpu.dot_dimension_numbers<[1], [0], [0], [1], [0, 0, 1, 1], [], []>} : vector<8x16xf32>, vector<16x34xf32>, vector<8x34xf32> -> vector<8x34xf32>
    %4 = vector.shape_cast %3 : vector<8x34xf32> to vector<1x8x34xf32>
    %5 = vector.extract_strided_slice %4 {offsets = [0, 0, 0], sizes = [1, 8, 32], strides = [1, 1, 1]} : vector<1x8x34xf32> to vector<1x8x32xf32>
    %6 = vector.extract_strided_slice %4 {offsets = [0, 0, 32], sizes = [1, 8, 1], strides = [1, 1, 1]} : vector<1x8x34xf32> to vector<1x8x1xf32>
    %7 = vector.extract_strided_slice %4 {offsets = [0, 0, 33], sizes = [1, 8, 1], strides = [1, 1, 1]} : vector<1x8x34xf32> to vector<1x8x1xf32>
    %cst_4 = arith.constant 1.000000e+00 : f32
    %8 = vector.broadcast %cst_4 : f32 to vector<1x8x1xf32>
    %cst_5 = arith.constant dense<0.000000e+00> : vector<1x8x8xf32>
    %9 = tpu.matmul %8, %7, %cst_5 {dimension_numbers = #tpu.dot_dimension_numbers<[2], [2], [1], [1], [0, 0, 0, 1, 1, 1], [0], [0]>} : vector<1x8x1xf32>, vector<1x8x1xf32>, vector<1x8x8xf32> -> vector<1x8x8xf32>
    %10 = vector.broadcast %6 : vector<1x8x1xf32> to vector<1x8x8xf32>
    %11 = arith.addf %10, %9 : vector<1x8x8xf32>
    %cst_6 = arith.constant 0.000000e+00 : f32
    %12 = vector.broadcast %cst_6 : f32 to vector<1x8x8xf32>
    %13 = arith.cmpf ogt, %11, %12 : vector<1x8x8xf32>
    %cst_7 = arith.constant 2.000000e-01 : f32
    %14 = vector.broadcast %cst_7 : f32 to vector<1x8x8xf32>
    %15 = arith.mulf %14, %11 : vector<1x8x8xf32>
    %16 = arith.select %13, %11, %15 : vector<1x8x8xi1>, vector<1x8x8xf32>
    %c0_8 = arith.constant 0 : index
    %c0_9 = arith.constant 0 : index
    %c0_10 = arith.constant 0 : index
    %17 = vector.load %arg2[%c0_8, %c0_9, %c0_10] : memref<1x8x8xf32, #tpu.memory_space<vmem>>, vector<1x8x8xf32>
    %cst_11 = arith.constant 0.000000e+00 : f32
    %18 = vector.broadcast %cst_11 : f32 to vector<1x8x8xf32>
    %19 = arith.cmpf ogt, %17, %18 : vector<1x8x8xf32>
    %cst_12 = arith.constant -9.000000e+15 : f32
    %20 = vector.broadcast %cst_12 : f32 to vector<1x8x8xf32>
    %21 = arith.select %19, %16, %20 : vector<1x8x8xi1>, vector<1x8x8xf32>
    %cst_13 = arith.constant dense<0xFF800000> : vector<1x8xf32>
    %22 = vector.multi_reduction <maximumf>, %21, %cst_13 [2] : vector<1x8x8xf32> to vector<1x8xf32>
    %23 = vector.shape_cast %22 : vector<1x8xf32> to vector<1x8x1xf32>
    %24 = vector.broadcast %23 : vector<1x8x1xf32> to vector<1x8x8xf32>
    %25 = arith.subf %21, %24 : vector<1x8x8xf32>
    %26 = math.exp %25 : vector<1x8x8xf32>
    %cst_14 = arith.constant dense<0.000000e+00> : vector<1x8xf32>
    %27 = vector.multi_reduction <add>, %26, %cst_14 [2] : vector<1x8x8xf32> to vector<1x8xf32>
    %28 = vector.shape_cast %27 : vector<1x8xf32> to vector<1x8x1xf32>
    %29 = tpu.reciprocal %28 {approx = true} : vector<1x8x1xf32> -> vector<1x8x1xf32>
    %30 = arith.mulf %28, %29 : vector<1x8x1xf32>
    %cst_15 = arith.constant 2.000000e+00 : f32
    %31 = vector.broadcast %cst_15 : f32 to vector<1x8x1xf32>
    %32 = arith.subf %31, %30 : vector<1x8x1xf32>
    %33 = arith.mulf %29, %32 : vector<1x8x1xf32>
    %34 = vector.broadcast %33 : vector<1x8x1xf32> to vector<1x8x8xf32>
    %35 = arith.mulf %26, %34 : vector<1x8x8xf32>
    "tpu.trace_start"() <{level = 10 : i32, message = "bij,bjh->bih"}> : () -> ()
    %cst_16 = arith.constant dense<0.000000e+00> : vector<1x8x32xf32>
    %36 = tpu.matmul %35, %5, %cst_16 {dimension_numbers = #tpu.dot_dimension_numbers<[2], [1], [1], [2], [0, 0, 0, 1, 1, 2], [0], [0]>} : vector<1x8x8xf32>, vector<1x8x32xf32>, vector<1x8x32xf32> -> vector<1x8x32xf32>
    %cst_17 = arith.constant 0.000000e+00 : f32
    "tpu.trace_stop"() : () -> ()
    %37 = vector.broadcast %cst_17 : f32 to vector<1x8x32xf32>
    %38 = arith.cmpf ogt, %36, %37 : vector<1x8x32xf32>
    %cst_18 = arith.constant 0.000000e+00 : f32
    %39 = vector.broadcast %cst_18 : f32 to vector<1x8x32xf32>
    %40 = arith.minimumf %36, %39 : vector<1x8x32xf32>
    %41 = math.exp %40 : vector<1x8x32xf32>
    %cst_19 = arith.constant 1.000000e+00 : f32
    %42 = vector.broadcast %cst_19 : f32 to vector<1x8x32xf32>
    %43 = arith.subf %41, %42 : vector<1x8x32xf32>
    %44 = arith.select %38, %36, %43 : vector<1x8x32xi1>, vector<1x8x32xf32>
    %45 = vector.shape_cast %44 : vector<1x8x32xf32> to vector<8x32xf32>
    %c0_20 = arith.constant 0 : index
    %c0_21 = arith.constant 0 : index
    %46 = vector.load %arg4[%c0_20, %c0_21] : memref<32x32xf32, #tpu.memory_space<vmem>>, vector<32x32xf32>
    %cst_22 = arith.constant dense<0.000000e+00> : vector<8x32xf32>
    %47 = tpu.matmul %45, %46, %cst_22 {dimension_numbers = #tpu.dot_dimension_numbers<[1], [0], [0], [1], [0, 0, 1, 1], [], []>} : vector<8x32xf32>, vector<32x32xf32>, vector<8x32xf32> -> vector<8x32xf32>
    %c0_23 = arith.constant 0 : index
    %c0_24 = arith.constant 0 : index
    %48 = vector.load %arg5[%c0_23, %c0_24] : memref<1x32xf32, #tpu.memory_space<vmem>>, vector<1x32xf32>
    %49 = vector.broadcast %48 : vector<1x32xf32> to vector<8x32xf32>
    %50 = arith.addf %47, %49 : vector<8x32xf32>
    %cst_25 = arith.constant 0.000000e+00 : f32
    %51 = vector.broadcast %cst_25 : f32 to vector<8x32xf32>
    %52 = arith.maximumf %50, %51 : vector<8x32xf32>
    %c0_26 = arith.constant 0 : index
    %c0_27 = arith.constant 0 : index
    %53 = vector.load %arg6[%c0_26, %c0_27] : memref<1x32xf32, #tpu.memory_space<vmem>>, vector<1x32xf32>
    %cst_28 = arith.constant dense<0.000000e+00> : vector<1x8xf32>
    %54 = tpu.matmul %53, %52, %cst_28 {dimension_numbers = #tpu.dot_dimension_numbers<[1], [1], [0], [0], [0, 0, 1, 0], [], []>} : vector<1x32xf32>, vector<8x32xf32>, vector<1x8xf32> -> vector<1x8xf32>
    %c0_29 = arith.constant 0 : index
    %c0_30 = arith.constant 0 : index
    %55 = vector.load %arg7[%c0_29, %c0_30] : memref<1x1xf32, #tpu.memory_space<vmem>>, vector<1x1xf32>
    %56 = vector.broadcast %55 : vector<1x1xf32> to vector<1x8xf32>
    %57 = arith.addf %54, %56 : vector<1x8xf32>
    %c0_31 = arith.constant 0 : index
    %c0_32 = arith.constant 0 : index
    %c0_33 = arith.constant 0 : index
    %58 = vector.load %arg8[%c0_31, %c0_32, %c0_33] : memref<1x1x8xf32, #tpu.memory_space<vmem>>, vector<1x1x8xf32>
    %59 = vector.shape_cast %58 : vector<1x1x8xf32> to vector<1x8xf32>
    %60 = vector.shape_cast %57 : vector<1x8xf32> to vector<1x1x8xf32>
    tpu.vector_store %arg8[%c0_31, %c0_32, %c0_33], %60 {strides = array<i32>} : memref<1x1x8xf32, #tpu.memory_space<vmem>>, vector<1x1x8xf32>,
    return
  }
  func.func @transform_0(%arg0: i32) -> (i32, i32, i32) {
    %c0_i32 = arith.constant 0 : i32
    %c0_i32_0 = arith.constant 0 : i32
    %c0_i32_1 = arith.constant 0 : i32
    return %arg0, %c0_i32, %c0_i32_0 : i32, i32, i32
  }
  func.func @transform_1(%arg0: i32) -> (i32, i32, i32) {
    %c0_i32 = arith.constant 0 : i32
    %c0_i32_0 = arith.constant 0 : i32
    %c0_i32_1 = arith.constant 0 : i32
    return %arg0, %c0_i32, %c0_i32_0 : i32, i32, i32
  }
  func.func @transform_2(%arg0: i32) -> (i32, i32) {
    %c0_i32 = arith.constant 0 : i32
    %c0_i32_0 = arith.constant 0 : i32
    %c0_i32_1 = arith.constant 0 : i32
    return %c0_i32, %c0_i32_0 : i32, i32
  }
  func.func @transform_3(%arg0: i32) -> (i32, i32) {
    %c0_i32 = arith.constant 0 : i32
    %c0_i32_0 = arith.constant 0 : i32
    %c0_i32_1 = arith.constant 0 : i32
    return %c0_i32, %c0_i32_0 : i32, i32
  }
  func.func @transform_4(%arg0: i32) -> (i32, i32) {
    %c0_i32 = arith.constant 0 : i32
    %c0_i32_0 = arith.constant 0 : i32
    %c0_i32_1 = arith.constant 0 : i32
    return %c0_i32, %c0_i32_0 : i32, i32
  }
  func.func @transform_5(%arg0: i32) -> (i32, i32) {
    %c0_i32 = arith.constant 0 : i32
    %c0_i32_0 = arith.constant 0 : i32
    %c0_i32_1 = arith.constant 0 : i32
    return %c0_i32, %c0_i32_0 : i32, i32
  }
  func.func @transform_6(%arg0: i32) -> (i32, i32) {
    %c0_i32 = arith.constant 0 : i32
    %c0_i32_0 = arith.constant 0 : i32
    %c0_i32_1 = arith.constant 0 : i32
    return %c0_i32, %c0_i32_0 : i32, i32
  }
  func.func @transform_7(%arg0: i32) -> (i32, i32, i32) {
    %c0_i32 = arith.constant 0 : i32
    %c0_i32_0 = arith.constant 0 : i32
    %c0_i32_1 = arith.constant 0 : i32
    return %arg0, %c0_i32, %c0_i32_0 : i32, i32, i32
  }
}

</mosaic_0001>

<llo_original>
// kernel: tpu_custom_call.1
$region0: #{tpu_custom_call.1}
  #allocation0 [shape = 'u32[]', space=smem, size = 0x4, offset = 0x4, fixed_abs, tag = 'smem constant byte address 0x4 - core index']
  #allocation1 [shape = 'u32[144,128]{1,0:T(1,128)}', space=vmem, size = 0x12000, scoped, tag = 'internal scratch']
  #allocation2 [shape = 'f32[1,1]{1,0:T(1,128)S(1)}', space=vmem, size = 0x200, scoped, tag = 'scoped memory for tpu_custom_call.1']
  %s0 = inlined_call_operand.hbm [shape: f32[2,8,16], index: 0, kind: input, shape index: {}]
  %s1 = inlined_call_operand.hbm [shape: f32[2,8,8], index: 1, kind: input, shape index: {}]
  %s2 = inlined_call_operand.hbm [shape: f32[16,34], index: 2, kind: input, shape index: {}]
  %s3 = inlined_call_operand.hbm [shape: f32[32,32], index: 3, kind: input, shape index: {}]
  %s4 = inlined_call_operand.vmem [shape: f32[1,32], index: 4, kind: input, shape index: {}]
  %s5 = inlined_call_operand.vmem [shape: f32[1,32], index: 5, kind: input, shape index: {}]
  %s6 = inlined_call_operand.<no memory space> [shape: f32[1,1], index: 6, kind: input, shape index: {}]
  %s7 = inlined_call_operand.hbm [shape: f32[2,1,8], index: 7, kind: output, shape index: {}]
  %s8 = sld [smem:[#allocation0]]
  $region77: #{tpu_custom_call.1} parent=0
    _
  %s10 = ssub.s32 1, %s8
  %s11 = scalar_select 0, %s10, %s8
  %v12 = vstv %s6
  %13 = vst [vmem:[#allocation2] sm:$0x1] %v12
  $region1: #{tpu_custom_call.1} parent=0
    #allocation3 [shape = 'u8[8192]{0}', space=vmem, size = 0x2000, scoped, tag = 'input window, operand 0']
    #allocation4 [shape = 's32[2]{0}', space=sflag, size = 0x8, scoped, tag = 'scoped memory for tpu_custom_call.1']
    #allocation5 [shape = 's32[2]{0}', space=sflag, size = 0x8, scoped, tag = 'scoped memory for tpu_custom_call.1']
    #allocation6 [shape = 'u8[8192]{0}', space=vmem, size = 0x2000, scoped, tag = 'input window, operand 1']
    #allocation7 [shape = 's32[2]{0}', space=sflag, size = 0x8, scoped, tag = 'scoped memory for tpu_custom_call.1']
    #allocation8 [shape = 'u8[8192]{0}', space=vmem, size = 0x2000, scoped, tag = 'input window, operand 2, single buffered']
    #allocation9 [shape = 'u8[16384]{0}', space=vmem, size = 0x4000, scoped, tag = 'input window, operand 3, single buffered']
    #allocation10 [shape = 's32[1]{0}', space=sflag, size = 0x4, scoped, tag = 'scoped memory for tpu_custom_call.1']
    #allocation11 [shape = 'u8[1024]{0}', space=vmem, size = 0x400, scoped, tag = 'output window, operand 0']
    %14 = vsyncpa [#allocation4], 0
    %s15 = scalar_lea.sflag [#allocation4], 1
    %16 = vsyncpa %s15, 0
    %17 = vsyncpa [#allocation7], 0
    %s18 = scalar_lea.sflag [#allocation7], 1
    %19 = vsyncpa %s18, 0
    %20 = vsyncpa [#allocation10], 0
    %21 = vsyncpa [#allocation5], 0
    %s22 = scalar_lea.sflag [#allocation5], 1
    %23 = vsyncpa %s22, 0
    loop: start=0, step=1, limit=4
    $region2: #{tpu_custom_call.1} parent=1 // loop_pre_header
      _
    $region3: #{tpu_custom_call.1} parent=1 // loop_header
      %s25 = sphi 0, %s29
      %p26 = scmp.ge.s32.totalorder %s25, 4
      %s35 = sphi 0, %s37
      %s38 = sphi 0, %s35
      %s39 = sphi 0, %s38
      %s55 = sphi 0, %s39
      %s61 = sphi 0, %s63
      %s64 = sphi 0, %s61
      %s65 = sphi 0, %s64
      %s81 = sphi 0, %s65
      %s85 = sphi 0, %s85
      %s87 = sphi 0, %s85
      %s88 = sphi 0, %s87
      %s102 = sphi 0, %s88
      %s106 = sphi 0, %s106
      %s108 = sphi 0, %s106
      %s109 = sphi 0, %s108
      %s123 = sphi 0, %s109
      %s127 = sphi 0, %s127
      %s129 = sphi 0, %s127
      %s130 = sphi 0, %s129
      %s144 = sphi 0, %s130
      %s148 = sphi 0, %s148
      %s150 = sphi 0, %s148
      %s151 = sphi 0, %s150
      %s165 = sphi 0, %s151
      %s169 = sphi 0, %s169
      %s171 = sphi 0, %s169
      %s172 = sphi 0, %s171
      %s186 = sphi 0, %s172
      %s192 = sphi 0, %s194
      %s195 = sphi 0, %s192
      %s196 = sphi 0, %s195
      %s212 = sphi 0, %s196
    $region4: #{tpu_custom_call.1} parent=1 // loop_header_branch
      %28 = sbr.rel (%p26) target = $region8
    $region5: #{tpu_custom_call.1} parent=1 // loop_body
      %s30 = ssub.s32 %s25, 1
      %s31 = ssub.s32 %s25, 2
      %s32 = sadd.s32 %s25, 1
      %s33 = ssub.s32 %s25, %s32
      %p34 = scmp.eq.s32.totalorder %s33, 0
      %s36 = sadd.s32 %s35, 1
      %s37 = scalar_select %p34, %s35, %s36
      %p40 = pneg %p34
      %p41 = scmp.eq.s32.totalorder %s25, 1
      %p42 = por %p40, %p41
      %p43 = scmp.ne.s32.totalorder %s35, %s38
      %p44 = scmp.eq.s32.totalorder %s25, 0
      %p45 = por %p43, %p44
      %p46 = scmp.ne.s32.totalorder %s35, %s38
      %p47 = scmp.eq.s32.totalorder %s30, 1
      %p48 = por %p46, %p47
      %p49 = scmp.ne.s32.totalorder %s38, %s39
      %p50 = scmp.eq.s32.totalorder %s30, 0
      %p51 = por %p49, %p50
      %p52 = scmp.ne.s32.totalorder %s38, %s39
      %p53 = scmp.eq.s32.totalorder %s31, 1
      %p54 = por %p52, %p53
      %p56 = scmp.ne.s32.totalorder %s39, %s55
      %p57 = scmp.eq.s32.totalorder %s31, 0
      %p58 = por %p56, %p57
      %s59 = ssub.s32 %s25, %s32
      %p60 = scmp.eq.s32.totalorder %s59, 0
      %s62 = sadd.s32 %s61, 1
      %s63 = scalar_select %p60, %s61, %s62
      %p66 = pneg %p60
      %p67 = scmp.eq.s32.totalorder %s25, 1
      %p68 = por %p66, %p67
      %p69 = scmp.ne.s32.totalorder %s61, %s64
      %p70 = scmp.eq.s32.totalorder %s25, 0
      %p71 = por %p69, %p70
      %p72 = scmp.ne.s32.totalorder %s61, %s64
      %p73 = scmp.eq.s32.totalorder %s30, 1
      %p74 = por %p72, %p73
      %p75 = scmp.ne.s32.totalorder %s64, %s65
      %p76 = scmp.eq.s32.totalorder %s30, 0
      %p77 = por %p75, %p76
      %p78 = scmp.ne.s32.totalorder %s64, %s65
      %p79 = scmp.eq.s32.totalorder %s31, 1
      %p80 = por %p78, %p79
      %p82 = scmp.ne.s32.totalorder %s65, %s81
      %p83 = scmp.eq.s32.totalorder %s31, 0
      %p84 = por %p82, %p83
      %s86 = sadd.s32 %s85, 1
      %p89 = scmp.eq.s32.totalorder %s25, 1
      %p90 = scmp.ne.s32.totalorder %s85, %s87
      %p91 = scmp.eq.s32.totalorder %s25, 0
      %p92 = por %p90, %p91
      %p93 = scmp.ne.s32.totalorder %s85, %s87
      %p94 = scmp.eq.s32.totalorder %s30, 1
      %p95 = por %p93, %p94
      %p96 = scmp.ne.s32.totalorder %s87, %s88
      %p97 = scmp.eq.s32.totalorder %s30, 0
      %p98 = por %p96, %p97
      %p99 = scmp.ne.s32.totalorder %s87, %s88
      %p100 = scmp.eq.s32.totalorder %s31, 1
      %p101 = por %p99, %p100
      %p103 = scmp.ne.s32.totalorder %s88, %s102
      %p104 = scmp.eq.s32.totalorder %s31, 0
      %p105 = por %p103, %p104
      %s107 = sadd.s32 %s106, 1
      %p110 = scmp.eq.s32.totalorder %s25, 1
      %p111 = scmp.ne.s32.totalorder %s106, %s108
      %p112 = scmp.eq.s32.totalorder %s25, 0
      %p113 = por %p111, %p112
      %p114 = scmp.ne.s32.totalorder %s106, %s108
      %p115 = scmp.eq.s32.totalorder %s30, 1
      %p116 = por %p114, %p115
      %p117 = scmp.ne.s32.totalorder %s108, %s109
      %p118 = scmp.eq.s32.totalorder %s30, 0
      %p119 = por %p117, %p118
      %p120 = scmp.ne.s32.totalorder %s108, %s109
      %p121 = scmp.eq.s32.totalorder %s31, 1
      %p122 = por %p120, %p121
      %p124 = scmp.ne.s32.totalorder %s109, %s123
      %p125 = scmp.eq.s32.totalorder %s31, 0
      %p126 = por %p124, %p125
      %s128 = sadd.s32 %s127, 1
      %p131 = scmp.eq.s32.totalorder %s25, 1
      %p132 = scmp.ne.s32.totalorder %s127, %s129
      %p133 = scmp.eq.s32.totalorder %s25, 0
      %p134 = por %p132, %p133
      %p135 = scmp.ne.s32.totalorder %s127, %s129
      %p136 = scmp.eq.s32.totalorder %s30, 1
      %p137 = por %p135, %p136
      %p138 = scmp.ne.s32.totalorder %s129, %s130
      %p139 = scmp.eq.s32.totalorder %s30, 0
      %p140 = por %p138, %p139
      %p141 = scmp.ne.s32.totalorder %s129, %s130
      %p142 = scmp.eq.s32.totalorder %s31, 1
      %p143 = por %p141, %p142
      %p145 = scmp.ne.s32.totalorder %s130, %s144
      %p146 = scmp.eq.s32.totalorder %s31, 0
      %p147 = por %p145, %p146
      %s149 = sadd.s32 %s148, 1
      %p152 = scmp.eq.s32.totalorder %s25, 1
      %p153 = scmp.ne.s32.totalorder %s148, %s150
      %p154 = scmp.eq.s32.totalorder %s25, 0
      %p155 = por %p153, %p154
      %p156 = scmp.ne.s32.totalorder %s148, %s150
      %p157 = scmp.eq.s32.totalorder %s30, 1
      %p158 = por %p156, %p157
      %p159 = scmp.ne.s32.totalorder %s150, %s151
      %p160 = scmp.eq.s32.totalorder %s30, 0
      %p161 = por %p159, %p160
      %p162 = scmp.ne.s32.totalorder %s150, %s151
      %p163 = scmp.eq.s32.totalorder %s31, 1
      %p164 = por %p162, %p163
      %p166 = scmp.ne.s32.totalorder %s151, %s165
      %p167 = scmp.eq.s32.totalorder %s31, 0
      %p168 = por %p166, %p167
      %s170 = sadd.s32 %s169, 1
      %p173 = scmp.eq.s32.totalorder %s25, 1
      %p174 = scmp.ne.s32.totalorder %s169, %s171
      %p175 = scmp.eq.s32.totalorder %s25, 0
      %p176 = por %p174, %p175
      %p177 = scmp.ne.s32.totalorder %s169, %s171
      %p178 = scmp.eq.s32.totalorder %s30, 1
      %p179 = por %p177, %p178
      %p180 = scmp.ne.s32.totalorder %s171, %s172
      %p181 = scmp.eq.s32.totalorder %s30, 0
      %p182 = por %p180, %p181
      %p183 = scmp.ne.s32.totalorder %s171, %s172
      %p184 = scmp.eq.s32.totalorder %s31, 1
      %p185 = por %p183, %p184
      %p187 = scmp.ne.s32.totalorder %s172, %s186
      %p188 = scmp.eq.s32.totalorder %s31, 0
      %p189 = por %p187, %p188
      %s190 = ssub.s32 %s25, %s32
      %p191 = scmp.eq.s32.totalorder %s190, 0
      %s193 = sadd.s32 %s192, 1
      %s194 = scalar_select %p191, %s192, %s193
      %p197 = pneg %p191
      %p198 = scmp.eq.s32.totalorder %s25, 1
      %p199 = por %p197, %p198
      %p200 = scmp.ne.s32.totalorder %s192, %s195
      %p201 = scmp.eq.s32.totalorder %s25, 0
      %p202 = por %p200, %p201
      %p203 = scmp.ne.s32.totalorder %s192, %s195
      %p204 = scmp.eq.s32.totalorder %s30, 1
      %p205 = por %p203, %p204
      %p206 = scmp.ne.s32.totalorder %s195, %s196
      %p207 = scmp.eq.s32.totalorder %s30, 0
      %p208 = por %p206, %p207
      %p209 = scmp.ne.s32.totalorder %s195, %s196
      %p210 = scmp.eq.s32.totalorder %s31, 1
      %p211 = por %p209, %p210
      %p213 = scmp.ne.s32.totalorder %s196, %s212
      %p214 = scmp.eq.s32.totalorder %s31, 0
      %p215 = por %p213, %p214
      %p216 = scmp.le.s32.totalorder 1, %s25
      %p217 = scmp.lt.s32.totalorder %s25, 3
      %p218 = pnand %p216, %p217
      %p219 = pneg %p218
      // Predicated region
      $region9: #{tpu_custom_call.1} parent=5 // pred_check
        _
      $region10: #{tpu_custom_call.1} parent=5 // pred_check_branch
        %221 = sbr.rel (%p218) target = $region12
      $region11: #{tpu_custom_call.1} parent=5 // pred_region
        %s222 = ssub.s32 %s25, 1
        // Predicated region
        $region13: #{tpu_custom_call.1} parent=11 // pred_check
          %p223 = pneg %p98
        $region14: #{tpu_custom_call.1} parent=11 // pred_check_branch
          %225 = sbr.rel (%p223) target = $region16
        $region15: #{tpu_custom_call.1} parent=11 // pred_region
          %s227 = ssub.s32 256, 256
          %228 = vsyncadd [#allocation7], %s227
          %s229 = sshll.u32 [#allocation8], 4
          %s230 = int_to_ptr.vmem [resolvable:$true] %s229
          %235 = dma.hbm_to_vmem [thread:$0]  %s2, 256, %s230, [#allocation7], 128, 128, 8
        $region16: #{tpu_custom_call.1} parent=11 // pred_fallthru
          _
        // Predicated region
        $region17: #{tpu_custom_call.1} parent=11 // pred_check
          %p236 = pneg %p119
        $region18: #{tpu_custom_call.1} parent=11 // pred_check_branch
          %238 = sbr.rel (%p236) target = $region20
        $region19: #{tpu_custom_call.1} parent=11 // pred_region
          %s240 = ssub.s32 512, 512
          %241 = vsyncadd [#allocation10], %s240
          %s242 = sshll.u32 [#allocation9], 4
          %s243 = int_to_ptr.vmem [resolvable:$true] %s242
          %248 = dma.hbm_to_vmem [thread:$0]  %s3, 512, %s243, [#allocation10], 128, 128, 8
        $region20: #{tpu_custom_call.1} parent=11 // pred_fallthru
          _
        // Predicated region
        $region21: #{tpu_custom_call.1} parent=11 // pred_check
          %p249 = pneg %p140
        $region22: #{tpu_custom_call.1} parent=11 // pred_check_branch
          %251 = sbr.rel (%p249) target = $region24
        $region23: #{tpu_custom_call.1} parent=11 // pred_region
          _
        $region24: #{tpu_custom_call.1} parent=11 // pred_fallthru
          _
        // Predicated region
        $region25: #{tpu_custom_call.1} parent=11 // pred_check
          %p252 = pneg %p161
        $region26: #{tpu_custom_call.1} parent=11 // pred_check_branch
          %254 = sbr.rel (%p252) target = $region28
        $region27: #{tpu_custom_call.1} parent=11 // pred_region
          _
        $region28: #{tpu_custom_call.1} parent=11 // pred_fallthru
          _
        // Predicated region
        $region29: #{tpu_custom_call.1} parent=11 // pred_check
          %p255 = pneg %p182
        $region30: #{tpu_custom_call.1} parent=11 // pred_check_branch
          %257 = sbr.rel (%p255) target = $region32
        $region31: #{tpu_custom_call.1} parent=11 // pred_region
          _
        $region32: #{tpu_custom_call.1} parent=11 // pred_fallthru
          _
      $region12: #{tpu_custom_call.1} parent=5 // pred_fallthru
        _
      %p258 = scmp.lt.s32.totalorder %s25, 2
      // Predicated region
      $region33: #{tpu_custom_call.1} parent=5 // pred_check
        %p259 = pneg %p258
      $region34: #{tpu_custom_call.1} parent=5 // pred_check_branch
        %261 = sbr.rel (%p259) target = $region36
      $region35: #{tpu_custom_call.1} parent=5 // pred_region
        // Predicated region
        $region37: #{tpu_custom_call.1} parent=35 // pred_check
          %p262 = pneg %p45
        $region38: #{tpu_custom_call.1} parent=35 // pred_check_branch
          %264 = sbr.rel (%p262) target = $region40
        $region39: #{tpu_custom_call.1} parent=35 // pred_region
          %s265 = sand.u32 %s35, 1
          %s266 = scalar_lea.sflag [#allocation4], %s265
          %s267 = sand.u32 %s35, 1
          %s268 = smul.addr %s267, 8
          %s269 = scalar_lea.vmem [#allocation3], %s268
          %s271 = ssub.s32 128, 128
          %272 = vsyncadd %s266, %s271
          %s273 = smul.addr %s25, 128
          %s274 = scalar_lea.hbm %s0, %s273
          %s276 = sshll.u32 %s269, 4
          %s277 = int_to_ptr.vmem [resolvable:$true] %s276
          %279 = dma.hbm_to_vmem [thread:$0]  %s274, 128, %s277, %s266
        $region40: #{tpu_custom_call.1} parent=35 // pred_fallthru
          _
        // Predicated region
        $region41: #{tpu_custom_call.1} parent=35 // pred_check
          %p280 = pneg %p71
        $region42: #{tpu_custom_call.1} parent=35 // pred_check_branch
          %282 = sbr.rel (%p280) target = $region44
        $region43: #{tpu_custom_call.1} parent=35 // pred_region
          %s283 = sand.u32 %s25, 1
          %s284 = scalar_lea.sflag [#allocation7], %s283
          %s285 = sand.u32 %s61, 1
          %s286 = smul.addr %s285, 8
          %s287 = scalar_lea.vmem [#allocation6], %s286
          %s289 = ssub.s32 128, 128
          %290 = vsyncadd %s284, %s289
          %s291 = smul.addr %s25, 128
          %s292 = scalar_lea.hbm %s1, %s291
          %s294 = sshll.u32 %s287, 4
          %s295 = int_to_ptr.vmem [resolvable:$true] %s294
          %297 = dma.hbm_to_vmem [thread:$0]  %s292, 128, %s295, %s284
        $region44: #{tpu_custom_call.1} parent=35 // pred_fallthru
          _
      $region36: #{tpu_custom_call.1} parent=5 // pred_fallthru
        _
      %p298 = scmp.le.s32.totalorder 1, %s25
      %p299 = scmp.lt.s32.totalorder %s25, 3
      %p300 = pnand %p298, %p299
      %p301 = pneg %p300
      // Predicated region
      $region45: #{tpu_custom_call.1} parent=5 // pred_check
        _
      $region46: #{tpu_custom_call.1} parent=5 // pred_check_branch
        %303 = sbr.rel (%p300) target = $region48
      $region47: #{tpu_custom_call.1} parent=5 // pred_region
        %s304 = ssub.s32 %s25, 1
        %s305 = sand.u32 %s38, 1
        %s306 = scalar_lea.sflag [#allocation4], %s305
        %s307 = sand.u32 %s38, 1
        %s308 = smul.addr %s307, 8
        %s309 = scalar_lea.vmem [#allocation3], %s308
        // Predicated region
        $region49: #{tpu_custom_call.1} parent=47 // pred_check
          %p310 = pneg %p51
        $region50: #{tpu_custom_call.1} parent=47 // pred_check_branch
          %312 = sbr.rel (%p310) target = $region52
        $region51: #{tpu_custom_call.1} parent=47 // pred_region
          %313 = dma.done %s306, 128
        $region52: #{tpu_custom_call.1} parent=47 // pred_fallthru
          _
        %s314 = sand.u32 %s30, 1
        %s315 = scalar_lea.sflag [#allocation7], %s314
        %s316 = sand.u32 %s64, 1
        %s317 = smul.addr %s316, 8
        %s318 = scalar_lea.vmem [#allocation6], %s317
        // Predicated region
        $region53: #{tpu_custom_call.1} parent=47 // pred_check
          %p319 = pneg %p77
        $region54: #{tpu_custom_call.1} parent=47 // pred_check_branch
          %321 = sbr.rel (%p319) target = $region56
        $region55: #{tpu_custom_call.1} parent=47 // pred_region
          %322 = dma.done %s315, 128
        $region56: #{tpu_custom_call.1} parent=47 // pred_fallthru
          _
        // Predicated region
        $region57: #{tpu_custom_call.1} parent=47 // pred_check
          %p323 = pneg %p98
        $region58: #{tpu_custom_call.1} parent=47 // pred_check_branch
          %325 = sbr.rel (%p323) target = $region60
        $region59: #{tpu_custom_call.1} parent=47 // pred_region
          %326 = dma.done [#allocation7], 256
        $region60: #{tpu_custom_call.1} parent=47 // pred_fallthru
          _
        // Predicated region
        $region61: #{tpu_custom_call.1} parent=47 // pred_check
          %p327 = pneg %p119
        $region62: #{tpu_custom_call.1} parent=47 // pred_check_branch
          %329 = sbr.rel (%p327) target = $region64
        $region63: #{tpu_custom_call.1} parent=47 // pred_region
          %330 = dma.done [#allocation10], 512
        $region64: #{tpu_custom_call.1} parent=47 // pred_fallthru
          _
        %s331 = sand.u32 %s38, 1
        %s332 = scalar_lea.sflag [#allocation4], %s331
        %s333 = sand.u32 %s38, 1
        %s334 = smul.addr %s333, 8
        %s335 = scalar_lea.vmem [#allocation3], %s334
        %p336 = pneg %p51
        %p337 = pneg %p48
        %s338 = sand.u32 %s30, 1
        %s339 = scalar_lea.sflag [#allocation7], %s338
        %s340 = sand.u32 %s64, 1
        %s341 = smul.addr %s340, 8
        %s342 = scalar_lea.vmem [#allocation6], %s341
        %p343 = pneg %p77
        %p344 = pneg %p74
        %p345 = pneg %p98
        %p346 = pneg %p95
        %p347 = pneg %p119
        %p348 = pneg %p116
        %p349 = pneg %p140
        %p350 = pneg %p137
        %p351 = pneg %p161
        %p352 = pneg %p158
        %p353 = pneg %p182
        %p354 = pneg %p179
        %p355 = pneg %p208
        %p356 = pneg %p205
        %s357 = sand.u32 %s195, 1
        %s358 = scalar_lea.sflag [#allocation5], %s357
        %s359 = sand.u32 %s195, 1
        %s360 = scalar_lea.vmem [#allocation11], %s359
        %v361 = vld [vmem:[%s309] sm:$0xff]
        %v362 = vld [vmem:[#allocation8] sm:$0xff]
        %v363 = vld [vmem:[#allocation8 + $0x8] sm:$0xff]
        %vm364 = vcmask 130048
        %v366 = vsel %vm364, %v361, 0
        %368 = vmatprep.subr.mxu0 0.0
        %369 = vmatpush1.msra.mxu0 %v362
        %370 = vmatprep.subr.mxu0 0.0
        %371 = vmatpush1.msra.mxu0 %v363
        %372 = vmatprep.subr.mxu0 0.0
        %373 = vmatpush1.msra.mxu0 0.0
        %374 = vmatprep.subr.mxu0 0.0
        %375 = vmatpush1.msra.mxu0 0.0
        %376 = vmatprep.subr.mxu0 0.0
        %377 = vmatpush1.msra.mxu0 0.0
        %378 = vmatprep.subr.mxu0 0.0
        %379 = vmatpush1.msra.mxu0 0.0
        %380 = vmatprep.subr.mxu0 0.0
        %381 = vmatpush1.msra.mxu0 0.0
        %382 = vmatprep.subr.mxu0 0.0
        %383 = vmatpush1.msra.mxu0 0.0
        %384 = vmatprep.subr.mxu0 0.0
        %385 = vmatpush1.msra.mxu0 0.0
        %386 = vmatprep.subr.mxu0 0.0
        %387 = vmatpush1.msra.mxu0 0.0
        %388 = vmatprep.subr.mxu0 0.0
        %389 = vmatpush1.msra.mxu0 0.0
        %390 = vmatprep.subr.mxu0 0.0
        %391 = vmatpush1.msra.mxu0 0.0
        %392 = vmatprep.subr.mxu0 0.0
        %393 = vmatpush1.msra.mxu0 0.0
        %394 = vmatprep.subr.mxu0 0.0
        %395 = vmatpush1.msra.mxu0 0.0
        %396 = vmatprep.subr.mxu0 0.0
        %397 = vmatpush1.msra.mxu0 0.0
        %398 = vmatprep.subr.mxu0 0.0
        %399 = vmatpush1.msra.mxu0 0.0
        %400 = vmatprep.subr.mxu0 0.0
        %401 = vmatpush1.msra.mxu0 0.0
        %402 = vmatprep.subr.mxu0 0.0
        %403 = vmatpush1.msra.mxu0 0.0
        %404 = vmatprep.subr.mxu0 0.0
        %405 = vmatpush1.msra.mxu0 0.0
        %406 = vmatprep.subr.mxu0 0.0
        %407 = vmatpush1.msra.mxu0 0.0
        %408 = vmatprep.subr.mxu0 0.0
        %409 = vmatpush1.msra.mxu0 0.0
        %410 = vmatprep.subr.mxu0 0.0
        %411 = vmatpush1.msra.mxu0 0.0
        %412 = vmatprep.subr.mxu0 0.0
        %413 = vmatpush1.msra.mxu0 0.0
        %414 = vmatprep.subr.mxu0 0.0
        %415 = vmatpush1.msra.mxu0 0.0
        %416 = vmatprep.subr.mxu0 0.0
        %417 = vmatpush1.msra.mxu0 0.0
        %418 = vmatprep.subr.mxu0 0.0
        %419 = vmatpush1.msra.mxu0 0.0
        %420 = vmatprep.subr.mxu0 0.0
        %421 = vmatpush1.msra.mxu0 0.0
        %422 = vmatprep.subr.mxu0 0.0
        %423 = vmatpush1.msra.mxu0 0.0
        %424 = vmatprep.subr.mxu0 0.0
        %425 = vmatpush1.msra.mxu0 0.0
        %426 = vmatprep.subr.mxu0 0.0
        %427 = vmatpush1.msra.mxu0 0.0
        %428 = vmatprep.subr.mxu0 0.0
        %429 = vmatpush1.msra.mxu0 0.0
        %430 = vmatprep.subr.mxu0 0.0
        %431 = vmatpush1.msra.mxu0 0.0
        %432 = vmatprep.mubr.f32.mxu0 0.0
        %433 = vmatmul.mubr.f32.gmra.mrb[0].mxu0 %v366
        %v434 = vpop.f32.mrb[0].mxu0
        %v435 = vadd.f32 0.0, %v434
        %v436 = vpop.f32.mrb[0].mxu0
        %437 = vdwg.mxu0
        %439 = vrot.lane.b32.xlu0 %v435, 95
        %v440 = vpop.permute.xlu0 %439
        %vm441 = vcmask 7168
        %v443 = vsel %vm441, 1.0, 0
        %v445 = vsel %vm441, %v440, 0
        %447 = vmatprep.subr.mxu0 0.0
        %448 = vmatpush1.xpose.msra.mxu0 %v445
        %449 = vmatprep.subr.mxu0 0.0
        %450 = vmatpush1.xpose.msra.mxu0 0.0
        %451 = vmatprep.subr.mxu0 0.0
        %452 = vmatpush1.xpose.msra.mxu0 0.0
        %453 = vmatprep.subr.mxu0 0.0
        %454 = vmatpush1.xpose.msra.mxu0 0.0
        %455 = vmatprep.subr.mxu0 0.0
        %456 = vmatpush1.xpose.msra.mxu0 0.0
        %457 = vmatprep.subr.mxu0 0.0
        %458 = vmatpush1.xpose.msra.mxu0 0.0
        %459 = vmatprep.subr.mxu0 0.0
        %460 = vmatpush1.xpose.msra.mxu0 0.0
        %461 = vmatprep.subr.mxu0 0.0
        %462 = vmatpush1.xpose.msra.mxu0 0.0
        %463 = vmatprep.subr.mxu0 0.0
        %464 = vmatpush1.xpose.msra.mxu0 0.0
        %465 = vmatprep.subr.mxu0 0.0
        %466 = vmatpush1.xpose.msra.mxu0 0.0
        %467 = vmatprep.subr.mxu0 0.0
        %468 = vmatpush1.xpose.msra.mxu0 0.0
        %469 = vmatprep.subr.mxu0 0.0
        %470 = vmatpush1.xpose.msra.mxu0 0.0
        %471 = vmatprep.subr.mxu0 0.0
        %472 = vmatpush1.xpose.msra.mxu0 0.0
        %473 = vmatprep.subr.mxu0 0.0
        %474 = vmatpush1.xpose.msra.mxu0 0.0
        %475 = vmatprep.subr.mxu0 0.0
        %476 = vmatpush1.xpose.msra.mxu0 0.0
        %477 = vmatprep.subr.mxu0 0.0
        %478 = vmatpush1.xpose.msra.mxu0 0.0
        %479 = vmatprep.subr.mxu0 0.0
        %480 = vmatpush1.xpose.msra.mxu0 0.0
        %481 = vmatprep.subr.mxu0 0.0
        %482 = vmatpush1.xpose.msra.mxu0 0.0
        %483 = vmatprep.subr.mxu0 0.0
        %484 = vmatpush1.xpose.msra.mxu0 0.0
        %485 = vmatprep.subr.mxu0 0.0
        %486 = vmatpush1.xpose.msra.mxu0 0.0
        %487 = vmatprep.subr.mxu0 0.0
        %488 = vmatpush1.xpose.msra.mxu0 0.0
        %489 = vmatprep.subr.mxu0 0.0
        %490 = vmatpush1.xpose.msra.mxu0 0.0
        %491 = vmatprep.subr.mxu0 0.0
        %492 = vmatpush1.xpose.msra.mxu0 0.0
        %493 = vmatprep.subr.mxu0 0.0
        %494 = vmatpush1.xpose.msra.mxu0 0.0
        %495 = vmatprep.subr.mxu0 0.0
        %496 = vmatpush1.xpose.msra.mxu0 0.0
        %497 = vmatprep.subr.mxu0 0.0
        %498 = vmatpush1.xpose.msra.mxu0 0.0
        %499 = vmatprep.subr.mxu0 0.0
        %500 = vmatpush1.xpose.msra.mxu0 0.0
        %501 = vmatprep.subr.mxu0 0.0
        %502 = vmatpush1.xpose.msra.mxu0 0.0
        %503 = vmatprep.subr.mxu0 0.0
        %504 = vmatpush1.xpose.msra.mxu0 0.0
        %505 = vmatprep.subr.mxu0 0.0
        %506 = vmatpush1.xpose.msra.mxu0 0.0
        %507 = vmatprep.subr.mxu0 0.0
        %508 = vmatpush1.xpose.msra.mxu0 0.0
        %509 = vmatprep.subr.mxu0 0.0
        %510 = vmatpush1.xpose.msra.mxu0 0.0
        %511 = vmatprep.mubr.f32.mxu0 0.0
        %512 = vmatmul.mubr.f32.gmra.mrb[0].mxu0 %v443
        %v513 = vpop.f32.mrb[0].mxu0
        %v514 = vadd.f32 0.0, %v513
        %v515 = vpop.f32.mrb[0].mxu0
        %516 = vdwg.mxu0
        %517 = vset.pattern.permute.xlu0 32
        %518 = vperm.xlu0 %517, %v435
        %v519 = vpop.permute.xlu0 %518
        %v521 = vadd.f32 %v519, %v514
        %vm522 = vcmp.gt.f32.partialorder %v521, 0.0
        %v523 = vmul.f32 %v521, 0.2
        %v524 = vsel %vm522, %v521, %v523
        %v525 = vld [vmem:[%s318] sm:$0xff]
        %vm526 = vcmp.gt.f32.partialorder %v525, 0.0
        %v527 = vsel %vm526, %v524, -9e+15
        %vm528 = vcmask 64512
        %v529 = vsel %vm528, %v527, -inf
        %530 = vmax.xlane.f32.xlu0 %v529
        %v531 = vpop.xlane.xlu0 %530
        %v532 = vsub.f32 %v527, %v531
        %v533 = vmul.f32 %v532, 1.442695
        %v534 = vpow.pop %v533
        %v535 = vsel %vm528, %v534, 0.0
        %536 = vadd.xlane.f32.xlu0 %v535
        %v537 = vpop.xlane.xlu0 %536
        %v538 = vrcp.pop %v537
        %v539 = vmul.f32 %v537, %v538
        %v540 = vsub.f32 2.0, %v539
        %v541 = vmul.f32 %v538, %v540
        %v542 = vmul.f32 %v534, %v541
        %v544 = vsel %vm528, %v542, 0
        %546 = vmatprep.subr.mxu0 0.0
        %547 = vmatpush1.msra.mxu0 %v435
        %548 = vmatprep.subr.mxu0 0.0
        %549 = vmatpush1.msra.mxu0 0.0
        %550 = vmatprep.subr.mxu0 0.0
        %551 = vmatpush1.msra.mxu0 0.0
        %552 = vmatprep.subr.mxu0 0.0
        %553 = vmatpush1.msra.mxu0 0.0
        %554 = vmatprep.subr.mxu0 0.0
        %555 = vmatpush1.msra.mxu0 0.0
        %556 = vmatprep.subr.mxu0 0.0
        %557 = vmatpush1.msra.mxu0 0.0
        %558 = vmatprep.subr.mxu0 0.0
        %559 = vmatpush1.msra.mxu0 0.0
        %560 = vmatprep.subr.mxu0 0.0
        %561 = vmatpush1.msra.mxu0 0.0
        %562 = vmatprep.subr.mxu0 0.0
        %563 = vmatpush1.msra.mxu0 0.0
        %564 = vmatprep.subr.mxu0 0.0
        %565 = vmatpush1.msra.mxu0 0.0
        %566 = vmatprep.subr.mxu0 0.0
        %567 = vmatpush1.msra.mxu0 0.0
        %568 = vmatprep.subr.mxu0 0.0
        %569 = vmatpush1.msra.mxu0 0.0
        %570 = vmatprep.subr.mxu0 0.0
        %571 = vmatpush1.msra.mxu0 0.0
        %572 = vmatprep.subr.mxu0 0.0
        %573 = vmatpush1.msra.mxu0 0.0
        %574 = vmatprep.subr.mxu0 0.0
        %575 = vmatpush1.msra.mxu0 0.0
        %576 = vmatprep.subr.mxu0 0.0
        %577 = vmatpush1.msra.mxu0 0.0
        %578 = vmatprep.subr.mxu0 0.0
        %579 = vmatpush1.msra.mxu0 0.0
        %580 = vmatprep.subr.mxu0 0.0
        %581 = vmatpush1.msra.mxu0 0.0
        %582 = vmatprep.subr.mxu0 0.0
        %583 = vmatpush1.msra.mxu0 0.0
        %584 = vmatprep.subr.mxu0 0.0
        %585 = vmatpush1.msra.mxu0 0.0
        %586 = vmatprep.subr.mxu0 0.0
        %587 = vmatpush1.msra.mxu0 0.0
        %588 = vmatprep.subr.mxu0 0.0
        %589 = vmatpush1.msra.mxu0 0.0
        %590 = vmatprep.subr.mxu0 0.0
        %591 = vmatpush1.msra.mxu0 0.0
        %592 = vmatprep.subr.mxu0 0.0
        %593 = vmatpush1.msra.mxu0 0.0
        %594 = vmatprep.subr.mxu0 0.0
        %595 = vmatpush1.msra.mxu0 0.0
        %596 = vmatprep.subr.mxu0 0.0
        %597 = vmatpush1.msra.mxu0 0.0
        %598 = vmatprep.subr.mxu0 0.0
        %599 = vmatpush1.msra.mxu0 0.0
        %600 = vmatprep.subr.mxu0 0.0
        %601 = vmatpush1.msra.mxu0 0.0
        %602 = vmatprep.subr.mxu0 0.0
        %603 = vmatpush1.msra.mxu0 0.0
        %604 = vmatprep.subr.mxu0 0.0
        %605 = vmatpush1.msra.mxu0 0.0
        %606 = vmatprep.subr.mxu0 0.0
        %607 = vmatpush1.msra.mxu0 0.0
        %608 = vmatprep.subr.mxu0 0.0
        %609 = vmatpush1.msra.mxu0 0.0
        %610 = vmatprep.mubr.f32.mxu0 0.0
        %611 = vmatmul.mubr.f32.gmra.mrb[0].mxu0 %v544
        %v612 = vpop.f32.mrb[0].mxu0
        %v613 = vadd.f32 0.0, %v612
        %v614 = vpop.f32.mrb[0].mxu0
        %615 = vdwg.mxu0
        %vm616 = vcmp.gt.f32.partialorder %v613, 0.0
        %v617 = vmin.f32 %v613, 0.0
        %v618 = vmul.f32 %v617, 1.442695
        %v619 = vpow.pop %v618
        %v620 = vsub.f32 %v619, 1.0
        %v621 = vsel %vm616, %v613, %v620
        %v622 = vld [vmem:[#allocation9] sm:$0xff]
        %v623 = vld [vmem:[#allocation9 + $0x8] sm:$0xff]
        %v624 = vld [vmem:[#allocation9 + $0x10] sm:$0xff]
        %v625 = vld [vmem:[#allocation9 + $0x18] sm:$0xff]
        %v626 = vld [vmem:[%s4] sm:$0x1]
        %v628 = vlaneseq
        %v629 = vshrl.u32 %v628, 7
        %v630 = vsub.s32 0, %v629
        %v631 = vrot.slane %v626, %v630
        %vm633 = vcmask 261120
        %v635 = vsel %vm633, %v621, 0
        %637 = vmatprep.subr.mxu0 0.0
        %638 = vmatpush1.msra.mxu0 %v622
        %639 = vmatprep.subr.mxu0 0.0
        %640 = vmatpush1.msra.mxu0 %v623
        %641 = vmatprep.subr.mxu0 0.0
        %642 = vmatpush1.msra.mxu0 %v624
        %643 = vmatprep.subr.mxu0 0.0
        %644 = vmatpush1.msra.mxu0 %v625
        %645 = vmatprep.subr.mxu0 0.0
        %646 = vmatpush1.msra.mxu0 0.0
        %647 = vmatprep.subr.mxu0 0.0
        %648 = vmatpush1.msra.mxu0 0.0
        %649 = vmatprep.subr.mxu0 0.0
        %650 = vmatpush1.msra.mxu0 0.0
        %651 = vmatprep.subr.mxu0 0.0
        %652 = vmatpush1.msra.mxu0 0.0
        %653 = vmatprep.subr.mxu0 0.0
        %654 = vmatpush1.msra.mxu0 0.0
        %655 = vmatprep.subr.mxu0 0.0
        %656 = vmatpush1.msra.mxu0 0.0
        %657 = vmatprep.subr.mxu0 0.0
        %658 = vmatpush1.msra.mxu0 0.0
        %659 = vmatprep.subr.mxu0 0.0
        %660 = vmatpush1.msra.mxu0 0.0
        %661 = vmatprep.subr.mxu0 0.0
        %662 = vmatpush1.msra.mxu0 0.0
        %663 = vmatprep.subr.mxu0 0.0
        %664 = vmatpush1.msra.mxu0 0.0
        %665 = vmatprep.subr.mxu0 0.0
        %666 = vmatpush1.msra.mxu0 0.0
        %667 = vmatprep.subr.mxu0 0.0
        %668 = vmatpush1.msra.mxu0 0.0
        %669 = vmatprep.subr.mxu0 0.0
        %670 = vmatpush1.msra.mxu0 0.0
        %671 = vmatprep.subr.mxu0 0.0
        %672 = vmatpush1.msra.mxu0 0.0
        %673 = vmatprep.subr.mxu0 0.0
        %674 = vmatpush1.msra.mxu0 0.0
        %675 = vmatprep.subr.mxu0 0.0
        %676 = vmatpush1.msra.mxu0 0.0
        %677 = vmatprep.subr.mxu0 0.0
        %678 = vmatpush1.msra.mxu0 0.0
        %679 = vmatprep.subr.mxu0 0.0
        %680 = vmatpush1.msra.mxu0 0.0
        %681 = vmatprep.subr.mxu0 0.0
        %682 = vmatpush1.msra.mxu0 0.0
        %683 = vmatprep.subr.mxu0 0.0
        %684 = vmatpush1.msra.mxu0 0.0
        %685 = vmatprep.subr.mxu0 0.0
        %686 = vmatpush1.msra.mxu0 0.0
        %687 = vmatprep.subr.mxu0 0.0
        %688 = vmatpush1.msra.mxu0 0.0
        %689 = vmatprep.subr.mxu0 0.0
        %690 = vmatpush1.msra.mxu0 0.0
        %691 = vmatprep.subr.mxu0 0.0
        %692 = vmatpush1.msra.mxu0 0.0
        %693 = vmatprep.subr.mxu0 0.0
        %694 = vmatpush1.msra.mxu0 0.0
        %695 = vmatprep.subr.mxu0 0.0
        %696 = vmatpush1.msra.mxu0 0.0
        %697 = vmatprep.subr.mxu0 0.0
        %698 = vmatpush1.msra.mxu0 0.0
        %699 = vmatprep.subr.mxu0 0.0
        %700 = vmatpush1.msra.mxu0 0.0
        %701 = vmatprep.mubr.f32.mxu0 0.0
        %702 = vmatmul.mubr.f32.gmra.mrb[0].mxu0 %v635
        %v703 = vpop.f32.mrb[0].mxu0
        %v704 = vadd.f32 %v631, %v703
        %v705 = vpop.f32.mrb[0].mxu0
        %706 = vdwg.mxu0
        %v707 = vmax.f32 %v704, 0.0
        %v708 = vld [vmem:[%s5] sm:$0x1]
        %v709 = vld [vmem:[#allocation2] sm:$0x1]
        %711 = vset.pattern.permute.xlu0 0
        %712 = vperm.xlu0 %711, %v709
        %v713 = vpop.permute.xlu0 %712
        %v715 = vlaneseq
        %v716 = vshrl.u32 %v715, 7
        %v717 = vsub.s32 0, %v716
        %v718 = vrot.slane %v713, %v717
        %v720 = vsel %vm633, %v708, 0
        %v723 = vsel %vm633, %v707, 0
        %725 = vmatprep.subr.mxu0 0.0
        %726 = vmatpush1.xpose.msra.mxu0 %v723
        %727 = vmatprep.subr.mxu0 0.0
        %728 = vmatpush1.xpose.msra.mxu0 0.0
        %729 = vmatprep.subr.mxu0 0.0
        %730 = vmatpush1.xpose.msra.mxu0 0.0
        %731 = vmatprep.subr.mxu0 0.0
        %732 = vmatpush1.xpose.msra.mxu0 0.0
        %733 = vmatprep.subr.mxu0 0.0
        %734 = vmatpush1.xpose.msra.mxu0 0.0
        %735 = vmatprep.subr.mxu0 0.0
        %736 = vmatpush1.xpose.msra.mxu0 0.0
        %737 = vmatprep.subr.mxu0 0.0
        %738 = vmatpush1.xpose.msra.mxu0 0.0
        %739 = vmatprep.subr.mxu0 0.0
        %740 = vmatpush1.xpose.msra.mxu0 0.0
        %741 = vmatprep.subr.mxu0 0.0
        %742 = vmatpush1.xpose.msra.mxu0 0.0
        %743 = vmatprep.subr.mxu0 0.0
        %744 = vmatpush1.xpose.msra.mxu0 0.0
        %745 = vmatprep.subr.mxu0 0.0
        %746 = vmatpush1.xpose.msra.mxu0 0.0
        %747 = vmatprep.subr.mxu0 0.0
        %748 = vmatpush1.xpose.msra.mxu0 0.0
        %749 = vmatprep.subr.mxu0 0.0
        %750 = vmatpush1.xpose.msra.mxu0 0.0
        %751 = vmatprep.subr.mxu0 0.0
        %752 = vmatpush1.xpose.msra.mxu0 0.0
        %753 = vmatprep.subr.mxu0 0.0
        %754 = vmatpush1.xpose.msra.mxu0 0.0
        %755 = vmatprep.subr.mxu0 0.0
        %756 = vmatpush1.xpose.msra.mxu0 0.0
        %757 = vmatprep.subr.mxu0 0.0
        %758 = vmatpush1.xpose.msra.mxu0 0.0
        %759 = vmatprep.subr.mxu0 0.0
        %760 = vmatpush1.xpose.msra.mxu0 0.0
        %761 = vmatprep.subr.mxu0 0.0
        %762 = vmatpush1.xpose.msra.mxu0 0.0
        %763 = vmatprep.subr.mxu0 0.0
        %764 = vmatpush1.xpose.msra.mxu0 0.0
        %765 = vmatprep.subr.mxu0 0.0
        %766 = vmatpush1.xpose.msra.mxu0 0.0
        %767 = vmatprep.subr.mxu0 0.0
        %768 = vmatpush1.xpose.msra.mxu0 0.0
        %769 = vmatprep.subr.mxu0 0.0
        %770 = vmatpush1.xpose.msra.mxu0 0.0
        %771 = vmatprep.subr.mxu0 0.0
        %772 = vmatpush1.xpose.msra.mxu0 0.0
        %773 = vmatprep.subr.mxu0 0.0
        %774 = vmatpush1.xpose.msra.mxu0 0.0
        %775 = vmatprep.subr.mxu0 0.0
        %776 = vmatpush1.xpose.msra.mxu0 0.0
        %777 = vmatprep.subr.mxu0 0.0
        %778 = vmatpush1.xpose.msra.mxu0 0.0
        %779 = vmatprep.subr.mxu0 0.0
        %780 = vmatpush1.xpose.msra.mxu0 0.0
        %781 = vmatprep.subr.mxu0 0.0
        %782 = vmatpush1.xpose.msra.mxu0 0.0
        %783 = vmatprep.subr.mxu0 0.0
        %784 = vmatpush1.xpose.msra.mxu0 0.0
        %785 = vmatprep.subr.mxu0 0.0
        %786 = vmatpush1.xpose.msra.mxu0 0.0
        %787 = vmatprep.subr.mxu0 0.0
        %788 = vmatpush1.xpose.msra.mxu0 0.0
        %789 = vmatprep.mubr.f32.mxu0 0.0
        %790 = vmatmul.mubr.f32.gmra.mrb[0].mxu0 %v720
        %v791 = vpop.f32.mrb[0].mxu0
        %v792 = vadd.f32 %v718, %v791
        %v793 = vpop.f32.mrb[0].mxu0
        %794 = vdwg.mxu0
        %vm795 = vcmask 57344
        %796 = vst.msk [vmem:[%s360] sm:$0x1] %vm795, %v792
        %s797 = sand.u32 %s195, 1
        %s798 = scalar_lea.sflag [#allocation5], %s797
        %s799 = sand.u32 %s195, 1
        %s800 = scalar_lea.vmem [#allocation11], %s799
        // Predicated region
        $region65: #{tpu_custom_call.1} parent=47 // pred_check
          %p801 = pneg %p205
        $region66: #{tpu_custom_call.1} parent=47 // pred_check_branch
          %803 = sbr.rel (%p801) target = $region68
        $region67: #{tpu_custom_call.1} parent=47 // pred_region
          %s805 = ssub.s32 16, 16
          %806 = vsyncadd %s798, %s805
          %s807 = smul.addr %s30, 16
          %s808 = scalar_lea.hbm %s7, %s807
          %s810 = sshll.u32 %s800, 4
          %s811 = int_to_ptr.vmem [resolvable:$true] %s810
          %813 = dma.vmem_to_hbm [thread:$0]  %s811, 16, %s808, %s798
        $region68: #{tpu_custom_call.1} parent=47 // pred_fallthru
          _
      $region48: #{tpu_custom_call.1} parent=5 // pred_fallthru
        _
      %p814 = scmp.le.s32.totalorder 2, %s25
      // Predicated region
      $region69: #{tpu_custom_call.1} parent=5 // pred_check
        %p815 = pneg %p814
      $region70: #{tpu_custom_call.1} parent=5 // pred_check_branch
        %817 = sbr.rel (%p815) target = $region72
      $region71: #{tpu_custom_call.1} parent=5 // pred_region
        %s818 = ssub.s32 %s25, 2
        // Predicated region
        $region73: #{tpu_custom_call.1} parent=71 // pred_check
          %p819 = pneg %p211
        $region74: #{tpu_custom_call.1} parent=71 // pred_check_branch
          %821 = sbr.rel (%p819) target = $region76
        $region75: #{tpu_custom_call.1} parent=71 // pred_region
          %s822 = sand.u32 %s196, 1
          %s823 = scalar_lea.sflag [#allocation5], %s822
          %s824 = sand.u32 %s196, 1
          %s825 = scalar_lea.vmem [#allocation11], %s824
          %826 = dma.done %s823, 16
        $region76: #{tpu_custom_call.1} parent=71 // pred_fallthru
          _
      $region72: #{tpu_custom_call.1} parent=5 // pred_fallthru
        _
    $region6: #{tpu_custom_call.1} parent=1 // loop_footer
      %s29 = sadd.s32 1, %s25
    $region7: #{tpu_custom_call.1} parent=1 // loop_footer_branch
      %24 = sbr.rel target = $region3
    $region8: #{tpu_custom_call.1} parent=1 // loop_exit
      _
    %827 = vsyncpa [#allocation4], 1
    %s828 = scalar_lea.sflag [#allocation4], 1
    %829 = vsyncpa %s828, 1
    %830 = vsyncpa [#allocation7], 1
    %s831 = scalar_lea.sflag [#allocation7], 1
    %832 = vsyncpa %s831, 1
    %833 = vsyncpa [#allocation10], 1
    %834 = vsyncpa [#allocation5], 1
    %s835 = scalar_lea.sflag [#allocation5], 1
    %836 = vsyncpa %s835, 1

</llo_original>
